<compile_context>
chip_gen: v6e
topology: v6e:2x2x1
jax: 0.10.0
libtpu: 0.0.40
codegen_flags: <defaults>
</compile_context>

<pallas_src>
import functools

import jax
import jax.numpy as jnp
from jax import lax
from jax.experimental import pallas as pl
from jax.experimental.pallas import tpu as pltpu

_EPS = 1e-8            # torch.nn.functional.cosine_similarity default eps
_EPS2 = _EPS * _EPS    # clamp applied to squared norms (rsqrt formulation)


def _sublane_pack(dtype) -> int:
    """Sublane packing granularity: 8 rows (4-byte), 16 (2-byte), 32 (1-byte)."""
    itemsize = jnp.dtype(dtype).itemsize
    return 8 * max(4 // itemsize, 1)


def _scoped_vmem_limit() -> int:
    """Generation-aware scoped-VMEM request (safe on v5e/v6e/v7x)."""
    try:
        cap = int(pltpu.get_tpu_info().vmem_capacity_bytes)
    except Exception:
        cap = 64 << 20          # conservative (v7x per-core physical VMEM)
    return min(cap // 2, 32 << 20)


def _make_in_spec(block_shape, index_map, nbuf):
    """Input BlockSpec with optional deeper pipelining (guarded)."""
    if nbuf > 2:
        try:
            return pl.BlockSpec(block_shape, index_map,
                                pipeline_mode=pl.Buffered(int(nbuf)))
        except Exception:
            pass
    return pl.BlockSpec(block_shape, index_map)


# ---------------------------------------------------------------------------
# Dense layout (HW % 128 == 0): blocks are (bb, C, tile_r, 128).
# ---------------------------------------------------------------------------
def _color_loss_kernel_dense(x1_ref, x2_ref, out_ref, acc_ref, *,
                             n_rows, n_batch, bb, tile_r, n_inner,
                             mask_rows, mask_batch, fold_to_8):
    j = pl.program_id(2)

    @pl.when(j == 0)
    def _init():
        acc_ref[...] = jnp.zeros_like(acc_ref)

    x1 = x1_ref[...].astype(jnp.float32)            # (bb, C, tile_r, 128)
    x2 = x2_ref[...].astype(jnp.float32)

    dot = jnp.sum(x1 * x2, axis=1)                  # (bb, tile_r, 128)  VPU
    s1 = jnp.sum(x1 * x1, axis=1)
    s2 = jnp.sum(x2 * x2, axis=1)

    # rsqrt -> EUP slot; 1/(max(n1,eps)*max(n2,eps)) == rsqrt(max(s1,eps^2))*rsqrt(max(s2,eps^2))
    inv = lax.rsqrt(jnp.maximum(s1, _EPS2)) * lax.rsqrt(jnp.maximum(s2, _EPS2))
    cos = dot * inv                                 # (bb, tile_r, 128)

    if mask_rows:       # static: only emitted when the last row tile is partial
        o = pl.program_id(1)
        row = (o * n_inner + j) * tile_r + lax.broadcasted_iota(
            jnp.int32, cos.shape, 1)
        cos = jnp.where(row < n_rows, cos, 0.0)     # select: kills garbage/NaN
    if mask_batch:      # static: only emitted when the last batch block is partial
        i = pl.program_id(0)
        bidx = i * bb + lax.broadcasted_iota(jnp.int32, cos.shape, 0)
        cos = jnp.where(bidx < n_batch, cos, 0.0)

    part = jnp.sum(cos, axis=0)                     # (tile_r, 128)  major-axis VPU adds
    if fold_to_8:       # static: tile_r is a multiple of 8 and > 8
        part = part.reshape(tile_r // 8, 8, 128).sum(axis=0)   # (8, 128)
    acc_ref[...] += part                            # ~1 vreg read-modify-write

    @pl.when(j == pl.num_programs(2) - 1)
    def _finalize():
        out_ref[0, 0] = jnp.sum(acc_ref[...], keepdims=True)   # single reduce -> (1, 1)


# ---------------------------------------------------------------------------
# Demoted generic layout (HW % 128 != 0): blocks are (1, C, tile_n), pixels on
# lanes, per-step scalar accumulated directly in the resident output block.
# TODO(synk): route the bulk of the pixels through the dense rows layout and
# only handle the <128-pixel per-image tail here.
# ---------------------------------------------------------------------------
def _color_loss_kernel_lanes(x1_ref, x2_ref, out_ref, *, n_pix, tile_n, mask_lanes):
    j = pl.program_id(1)

    @pl.when(j == 0)
    def _init():
        out_ref[...] = jnp.zeros_like(out_ref)

    x1 = x1_ref[0].astype(jnp.float32)              # (C, tile_n)
    x2 = x2_ref[0].astype(jnp.float32)

    dot = jnp.sum(x1 * x2, axis=0, keepdims=True)   # (1, tile_n)
    s1 = jnp.sum(x1 * x1, axis=0, keepdims=True)
    s2 = jnp.sum(x2 * x2, axis=0, keepdims=True)

    inv = lax.rsqrt(jnp.maximum(s1, _EPS2)) * lax.rsqrt(jnp.maximum(s2, _EPS2))
    cos = dot * inv

    if mask_lanes:      # static: only emitted when the last pixel block is partial
        pix = j * tile_n + lax.broadcasted_iota(jnp.int32, cos.shape, 1)
        cos = jnp.where(pix < n_pix, cos, 0.0)

    out_ref[0] += jnp.sum(cos, keepdims=True)       # (1,1) per-step accumulate


def color_loss(img1, img2, *, block_bytes=4 << 20):
    """1 - mean(cosine_similarity over channel) for NCHW images. f32 scalar."""
    assert img1.shape == img2.shape
    B, C, H, W = img1.shape
    HW = H * W
    N = B * HW
    itemsize = jnp.dtype(img1.dtype).itemsize
    pack = _sublane_pack(img1.dtype)
    vmem_limit = _scoped_vmem_limit()

    if HW % 128 == 0:
        # Free reshape: NCHW is contiguous, channels-major within each batch
        # element; pixels become (rows, 128 lanes).
        R = HW // 128
        x1 = img1.reshape(B, C, R, 128)
        x2 = img2.reshape(B, C, R, 128)
        # VMEM footprint per batch element (rows padded to sublane packing).
        per_batch_bytes = C * (pl.cdiv(R, pack) * pack) * 128 * itemsize

        if per_batch_bytes >= block_bytes:
            # Large images: one batch element per block, tile the row axis.
            bb = 1
            max_rows = max((block_bytes // (C * 128 * itemsize)) // pack * pack, pack)
            if R <= max_rows:
                tile_r, n_row_tiles, mask_rows = R, 1, False     # full extent
            else:
                tile_r = max_rows                                # multiple of pack
                n_row_tiles = pl.cdiv(R, tile_r)
                mask_rows = (R % tile_r) != 0
            mask_batch = False
        else:
            # Small images: fold several batch elements into one block so each
            # grid step still moves ~block_bytes of data.
            bb = max(min(B, block_bytes // per_batch_bytes), 1)
            tile_r, n_row_tiles, mask_rows = R, 1, False         # rows full extent
            mask_batch = (B % bb) != 0
        n_b = pl.cdiv(B, bb)

        # Extra *parallel* axis over pixel tiles: keeps the second TensorCore
        # (v7x) busy when the batch-block count alone is 1 / odd.  Only used
        # when the row tiles split evenly (no out-of-range block indices).
        n_outer = 2 if (n_b % 2 == 1 and n_row_tiles >= 2
                        and n_row_tiles % 2 == 0) else 1
        n_inner = n_row_tiles // n_outer

        fold_to_8 = (tile_r % 8 == 0) and (tile_r > 8)
        acc_rows = 8 if (tile_r % 8 == 0) else tile_r            # tiny accumulator

        total_steps = n_b * n_outer * n_inner
        nbuf = 3 if total_steps >= 4 else 2

        kernel = functools.partial(
            _color_loss_kernel_dense,
            n_rows=R, n_batch=B, bb=bb, tile_r=tile_r, n_inner=n_inner,
            mask_rows=mask_rows, mask_batch=mask_batch, fold_to_8=fold_to_8)

        in_spec = _make_in_spec(
            (bb, C, tile_r, 128),
            lambda i, o, j: (i, 0, o * n_inner + j, 0),
            nbuf)

        partials = pl.pallas_call(
            kernel,
            out_shape=jax.ShapeDtypeStruct((n_b, n_outer, 1, 1), jnp.float32),
            grid_spec=pltpu.PrefetchScalarGridSpec(
                num_scalar_prefetch=0,
                grid=(n_b, n_outer, n_inner),
                in_specs=[in_spec, in_spec],
                out_specs=pl.BlockSpec((1, 1, 1, 1), lambda i, o, j: (i, o, 0, 0)),
                scratch_shapes=[pltpu.VMEM((acc_rows, 128), jnp.float32)],
            ),
            compiler_params=pltpu.CompilerParams(
                dimension_semantics=("parallel", "parallel", "arbitrary"),
                vmem_limit_bytes=vmem_limit),
        )(x1, x2)
    else:
        # Demoted generic path: pixels on the lane axis, C on sublanes.
        x1 = img1.reshape(B, C, HW)
        x2 = img2.reshape(B, C, HW)
        padded_c = pl.cdiv(C, pack) * pack          # sublane padding of C in VMEM
        max_tile_n = max((block_bytes // (padded_c * itemsize)) // 128 * 128, 128)
        if HW <= max_tile_n:
            tile_n, n_inner, mask = HW, 1, False     # full extent
        else:
            tile_n = max_tile_n                      # multiple of 128
            n_inner = pl.cdiv(HW, tile_n)
            mask = (HW % tile_n) != 0

        total_steps = B * n_inner
        nbuf = 3 if total_steps >= 4 else 2

        kernel = functools.partial(_color_loss_kernel_lanes,
                                   n_pix=HW, tile_n=tile_n, mask_lanes=mask)
        in_spec = _make_in_spec((1, C, tile_n), lambda i, j: (i, 0, j), nbuf)

        partials = pl.pallas_call(
            kernel,
            out_shape=jax.ShapeDtypeStruct((B, 1, 1), jnp.float32),
            grid_spec=pltpu.PrefetchScalarGridSpec(
                num_scalar_prefetch=0,
                grid=(B, n_inner),
                in_specs=[in_spec, in_spec],
                out_specs=pl.BlockSpec((1, 1, 1), lambda i, j: (i, 0, 0)),
            ),
            compiler_params=pltpu.CompilerParams(
                dimension_semantics=("parallel", "arbitrary"),
                vmem_limit_bytes=vmem_limit),
        )(x1, x2)

    return 1.0 - jnp.sum(partials) / jnp.float32(N)


def color_loss_ref(img1, img2):
    """Pure-JAX reference mirroring the PyTorch module."""
    _, C, _, _ = img1.shape
    a = jnp.transpose(img1, (0, 2, 3, 1)).reshape(-1, C).astype(jnp.float32)
    b = jnp.transpose(img2, (0, 2, 3, 1)).reshape(-1, C).astype(jnp.float32)
    na = jnp.maximum(jnp.linalg.norm(a, axis=-1), _EPS)
    nb = jnp.maximum(jnp.linalg.norm(b, axis=-1), _EPS)
    cos = jnp.sum(a * b, axis=-1) / (na * nb)
    return 1.0 - jnp.mean(cos)


if __name__ == "__main__":
    key = jax.random.PRNGKey(0)
    k1, k2 = jax.random.split(key)

    # Nominal module shapes (B=2, C=4, H=W=16): single-step batch-folded path.
    img1 = jax.random.uniform(k1, (2, 4, 16, 16), dtype=jnp.float32)
    img2 = jax.random.uniform(k2, (2, 4, 16, 16), dtype=jnp.float32)
    out = jax.block_until_ready(color_loss(img1, img2))
    ref = color_loss_ref(img1, img2)
    assert jnp.allclose(out, ref, atol=1e-5, rtol=1e-5), (out, ref)

    # Large-image path: row tiling + fold-to-(8,128) acc + masked partial tile.
    a = jax.random.uniform(k1, (2, 3, 80, 80), dtype=jnp.float32)   # R=50
    b = jax.random.uniform(k2, (2, 3, 80, 80), dtype=jnp.float32)
    out2 = jax.block_until_ready(color_loss(a, b, block_bytes=32 * 1024))
    ref2 = color_loss_ref(a, b)
    assert jnp.allclose(out2, ref2, atol=1e-5, rtol=1e-5), (out2, ref2)

    # Large-image path with the extra parallel pixel-tile axis (n_outer=2).
    a = jax.random.uniform(k1, (1, 3, 64, 64), dtype=jnp.float32)   # R=32
    b = jax.random.uniform(k2, (1, 3, 64, 64), dtype=jnp.float32)
    out3 = jax.block_until_ready(color_loss(a, b, block_bytes=32 * 1024))
    ref3 = color_loss_ref(a, b)
    assert jnp.allclose(out3, ref3, atol=1e-5, rtol=1e-5), (out3, ref3)

    # Small-image batch folding with a masked partial batch block.
    a = jax.random.uniform(k1, (5, 3, 16, 16), dtype=jnp.float32)
    b = jax.random.uniform(k2, (5, 3, 16, 16), dtype=jnp.float32)
    out4 = jax.block_until_ready(color_loss(a, b, block_bytes=32 * 1024))
    ref4 = color_loss_ref(a, b)
    assert jnp.allclose(out4, ref4, atol=1e-5, rtol=1e-5), (out4, ref4)

    # bf16 inputs (dtype-aware sublane packing; compute in f32 in-kernel).
    a = jax.random.uniform(k1, (2, 4, 32, 32), dtype=jnp.bfloat16)
    b = jax.random.uniform(k2, (2, 4, 32, 32), dtype=jnp.bfloat16)
    out5 = jax.block_until_ready(color_loss(a, b))
    ref5 = color_loss_ref(a, b)
    assert jnp.allclose(out5, ref5, atol=1e-4, rtol=1e-4), (out5, ref5)

    # Fallback path (HW % 128 != 0) with multiple steps and a masked tail.
    a = jax.random.uniform(k1, (2, 3, 20, 15), dtype=jnp.float32)   # HW=300
    b = jax.random.uniform(k2, (2, 3, 20, 15), dtype=jnp.float32)
    out6 = jax.block_until_ready(color_loss(a, b, block_bytes=8 * 1024))
    ref6 = color_loss_ref(a, b)
    assert jnp.allclose(out6, ref6, atol=1e-5, rtol=1e-5), (out6, ref6)

    print("KERNEL_OK")
</pallas_src>

<mosaic_0001>
module attributes {stable_mosaic.version = 11 : i64} {
  func.func @_color_loss_kernel_dense(%arg0: i32, %arg1: i32, %arg2: i32, %arg3: memref<2x4x2x128xf32, #tpu.memory_space<vmem>>, %arg4: memref<2x4x2x128xf32, #tpu.memory_space<vmem>>, %arg5: memref<1x1x1x1xf32, #tpu.memory_space<vmem>>, %arg6: memref<2x128xf32, #tpu.memory_space<vmem>>) attributes {dimension_semantics = [#tpu.dimension_semantics<parallel>, #tpu.dimension_semantics<parallel>, #tpu.dimension_semantics<arbitrary>], iteration_bounds = array<i64: 1, 1, 1>, scalar_prefetch = 0 : i64, scratch_operands = 1 : i64, tpu.core_type = #tpu.core_type<tc>, window_params = [{transform_indices = @transform_0, window_bounds = array<i64: 2, 4, 2, 128>}, {transform_indices = @transform_1, window_bounds = array<i64: 2, 4, 2, 128>}, {transform_indices = @transform_2, window_bounds = array<i64: 1, 1, 1, 1>}]} {
    %c0_i32 = arith.constant 0 : i32
    %0 = arith.cmpi eq, %arg2, %c0_i32 : i32
    %1 = arith.extui %0 : i1 to i32
    %c0_i32_0 = arith.constant 0 : i32
    %2 = arith.cmpi ne, %1, %c0_i32_0 : i32
    scf.if %2 {
      %cst_19 = arith.constant 0.000000e+00 : f32
      %26 = vector.broadcast %cst_19 : f32 to vector<2x128xf32>
      %c0_20 = arith.constant 0 : index
      %c0_21 = arith.constant 0 : index
      %27 = vector.load %arg6[%c0_20, %c0_21] : memref<2x128xf32, #tpu.memory_space<vmem>>, vector<2x128xf32>
      tpu.vector_store %arg6[%c0_20, %c0_21], %26 {strides = array<i32>} : memref<2x128xf32, #tpu.memory_space<vmem>>, vector<2x128xf32>,
    } else {
    }
    %c0 = arith.constant 0 : index
    %c0_1 = arith.constant 0 : index
    %c0_2 = arith.constant 0 : index
    %c0_3 = arith.constant 0 : index
    %3 = vector.load %arg3[%c0, %c0_1, %c0_2, %c0_3] : memref<2x4x2x128xf32, #tpu.memory_space<vmem>>, vector<2x4x2x128xf32>
    %c0_4 = arith.constant 0 : index
    %c0_5 = arith.constant 0 : index
    %c0_6 = arith.constant 0 : index
    %c0_7 = arith.constant 0 : index
    %4 = vector.load %arg4[%c0_4, %c0_5, %c0_6, %c0_7] : memref<2x4x2x128xf32, #tpu.memory_space<vmem>>, vector<2x4x2x128xf32>
    %5 = arith.mulf %3, %4 : vector<2x4x2x128xf32>
    %cst = arith.constant dense<0.000000e+00> : vector<2x2x128xf32>
    %6 = vector.multi_reduction <add>, %5, %cst [1] : vector<2x4x2x128xf32> to vector<2x2x128xf32>
    %7 = arith.mulf %3, %3 : vector<2x4x2x128xf32>
    %cst_8 = arith.constant dense<0.000000e+00> : vector<2x2x128xf32>
    %8 = vector.multi_reduction <add>, %7, %cst_8 [1] : vector<2x4x2x128xf32> to vector<2x2x128xf32>
    %9 = arith.mulf %4, %4 : vector<2x4x2x128xf32>
    %cst_9 = arith.constant dense<0.000000e+00> : vector<2x2x128xf32>
    %10 = vector.multi_reduction <add>, %9, %cst_9 [1] : vector<2x4x2x128xf32> to vector<2x2x128xf32>
    %cst_10 = arith.constant 1.000000e-16 : f32
    %11 = vector.broadcast %cst_10 : f32 to vector<2x2x128xf32>
    %12 = arith.maximumf %8, %11 : vector<2x2x128xf32>
    %13 = math.rsqrt %12 : vector<2x2x128xf32>
    %cst_11 = arith.constant 1.000000e-16 : f32
    %14 = vector.broadcast %cst_11 : f32 to vector<2x2x128xf32>
    %15 = arith.maximumf %10, %14 : vector<2x2x128xf32>
    %16 = math.rsqrt %15 : vector<2x2x128xf32>
    %17 = arith.mulf %13, %16 : vector<2x2x128xf32>
    %18 = arith.mulf %6, %17 : vector<2x2x128xf32>
    %cst_12 = arith.constant dense<0.000000e+00> : vector<2x128xf32>
    %19 = vector.multi_reduction <add>, %18, %cst_12 [0] : vector<2x2x128xf32> to vector<2x128xf32>
    %c0_13 = arith.constant 0 : index
    %c0_14 = arith.constant 0 : index
    %20 = vector.load %arg6[%c0_13, %c0_14] : memref<2x128xf32, #tpu.memory_space<vmem>>, vector<2x128xf32>
    %21 = arith.addf %20, %19 : vector<2x128xf32>
    %c0_15 = arith.constant 0 : index
    %c0_16 = arith.constant 0 : index
    %22 = vector.load %arg6[%c0_15, %c0_16] : memref<2x128xf32, #tpu.memory_space<vmem>>, vector<2x128xf32>
    tpu.vector_store %arg6[%c0_15, %c0_16], %21 {strides = array<i32>} : memref<2x128xf32, #tpu.memory_space<vmem>>, vector<2x128xf32>,
    %c0_i32_17 = arith.constant 0 : i32
    %23 = arith.cmpi eq, %arg2, %c0_i32_17 : i32
    %24 = arith.extui %23 : i1 to i32
    %c0_i32_18 = arith.constant 0 : i32
    %25 = arith.cmpi ne, %24, %c0_i32_18 : i32
    scf.if %25 {
      %c0_19 = arith.constant 0 : index
      %c0_20 = arith.constant 0 : index
      %26 = vector.load %arg6[%c0_19, %c0_20] : memref<2x128xf32, #tpu.memory_space<vmem>>, vector<2x128xf32>
      %27 = vector.shape_cast %26 : vector<2x128xf32> to vector<1x2x128xf32>
      %cst_21 = arith.constant dense<0.000000e+00> : vector<1xf32>
      %28 = vector.multi_reduction <add>, %27, %cst_21 [1, 2] : vector<1x2x128xf32> to vector<1xf32>
      %29 = vector.shape_cast %28 : vector<1xf32> to vector<1x1x1xf32>
      %30 = vector.extract %29[0, 0, 0] : f32 from vector<1x1x1xf32>
      %31 = vector.broadcast %30 : f32 to vector<1x1xf32>
      %c0_22 = arith.constant 0 : index
      %c0_23 = arith.constant 0 : index
      %c0_24 = arith.constant 0 : index
      %c0_25 = arith.constant 0 : index
      %32 = vector.load %arg5[%c0_22, %c0_23, %c0_24, %c0_25] : memref<1x1x1x1xf32, #tpu.memory_space<vmem>>, vector<1x1x1x1xf32>
      %33 = vector.shape_cast %32 : vector<1x1x1x1xf32> to vector<1x1xf32>
      %34 = vector.shape_cast %31 : vector<1x1xf32> to vector<1x1x1x1xf32>
      tpu.vector_store %arg5[%c0_22, %c0_23, %c0_24, %c0_25], %34 {strides = array<i32>} : memref<1x1x1x1xf32, #tpu.memory_space<vmem>>, vector<1x1x1x1xf32>,
    } else {
    }
    return
  }
  func.func @transform_0(%arg0: i32, %arg1: i32, %arg2: i32) -> (i32, i32, i32, i32) {
    %c1_i32 = arith.constant 1 : i32
    %0 = arith.muli %arg1, %c1_i32 : i32
    %1 = arith.addi %0, %arg2 : i32
    %c0_i32 = arith.constant 0 : i32
    %c0_i32_0 = arith.constant 0 : i32
    %c0_i32_1 = arith.constant 0 : i32
    return %arg0, %c0_i32, %1, %c0_i32_0 : i32, i32, i32, i32
  }
  func.func @transform_1(%arg0: i32, %arg1: i32, %arg2: i32) -> (i32, i32, i32, i32) {
    %c1_i32 = arith.constant 1 : i32
    %0 = arith.muli %arg1, %c1_i32 : i32
    %1 = arith.addi %0, %arg2 : i32
    %c0_i32 = arith.constant 0 : i32
    %c0_i32_0 = arith.constant 0 : i32
    %c0_i32_1 = arith.constant 0 : i32
    return %arg0, %c0_i32, %1, %c0_i32_0 : i32, i32, i32, i32
  }
  func.func @transform_2(%arg0: i32, %arg1: i32, %arg2: i32) -> (i32, i32, i32, i32) {
    %c0_i32 = arith.constant 0 : i32
    %c0_i32_0 = arith.constant 0 : i32
    %c0_i32_1 = arith.constant 0 : i32
    return %arg0, %arg1, %c0_i32, %c0_i32_0 : i32, i32, i32, i32
  }
}

</mosaic_0001>

<llo_original>
// kernel: tpu_custom_call.1
$region0: #{tpu_custom_call.1}
  #allocation0 [shape = 'u32[]', space=smem, size = 0x4, offset = 0x4, fixed_abs, tag = 'smem constant byte address 0x4 - core index']
  #allocation1 [shape = 'u32[144,128]{1,0:T(1,128)}', space=vmem, size = 0x12000, scoped, tag = 'internal scratch']
  #allocation2 [shape = 'f32[2,128]{1,0:T(2,128)}', space=vmem, size = 0x400, scoped, tag = 'scratch operand']
  %s0 = inlined_call_operand.hbm [shape: f32[2,4,2,128], index: 0, kind: input, shape index: {}]
  %s1 = inlined_call_operand.hbm [shape: f32[2,4,2,128], index: 1, kind: input, shape index: {}]
  %s2 = inlined_call_operand.hbm [shape: f32[1,1,1,1], index: 2, kind: output, shape index: {}]
  %s3 = sld [smem:[#allocation0]]
  $region34: #{tpu_custom_call.1} parent=0
    _
  %s5 = ssub.s32 1, %s3
  %s6 = scalar_select 0, %s5, %s3
  $region1: #{tpu_custom_call.1} parent=0
    #allocation3 [shape = 'u8[8192]{0}', space=vmem, size = 0x2000, scoped, tag = 'input window, operand 0, single buffered']
    #allocation4 [shape = 's32[1]{0}', space=sflag, size = 0x4, scoped, tag = 'scoped memory for tpu_custom_call.1']
    #allocation5 [shape = 's32[1]{0}', space=sflag, size = 0x4, scoped, tag = 'scoped memory for tpu_custom_call.1']
    #allocation6 [shape = 'u8[8192]{0}', space=vmem, size = 0x2000, scoped, tag = 'input window, operand 1, single buffered']
    #allocation7 [shape = 's32[1]{0}', space=sflag, size = 0x4, scoped, tag = 'scoped memory for tpu_custom_call.1']
    #allocation8 [shape = 'u8[512]{0}', space=vmem, size = 0x400, scoped, tag = 'output window, operand 0, single buffered']
    %7 = vsyncpa [#allocation4], 0
    %8 = vsyncpa [#allocation7], 0
    %9 = vsyncpa [#allocation5], 0
    // Predicated region
    $region2: #{tpu_custom_call.1} parent=1 // pred_check
      _
    $region3: #{tpu_custom_call.1} parent=1 // pred_check_branch
      %11 = sbr.rel (0) target = $region5
    $region4: #{tpu_custom_call.1} parent=1 // pred_region
      %s12 = sadd.s32 0, 0
      %s14 = ssub.s32 256, 256
      %15 = vsyncadd [#allocation4], %s14
      %s16 = smul.addr %s12, 32
      %s17 = scalar_lea.hbm %s0, %s16
      %s18 = sshll.u32 [#allocation3], 4
      %s19 = int_to_ptr.vmem [resolvable:$true] %s18
      %24 = dma.hbm_to_vmem [thread:$0]  %s17, 256, %s19, [#allocation4], 32, 32, 2
    $region5: #{tpu_custom_call.1} parent=1 // pred_fallthru
      _
    // Predicated region
    $region6: #{tpu_custom_call.1} parent=1 // pred_check
      _
    $region7: #{tpu_custom_call.1} parent=1 // pred_check_branch
      %26 = sbr.rel (0) target = $region9
    $region8: #{tpu_custom_call.1} parent=1 // pred_region
      %s27 = sadd.s32 0, 0
      %s29 = ssub.s32 256, 256
      %30 = vsyncadd [#allocation7], %s29
      %s31 = smul.addr %s27, 32
      %s32 = scalar_lea.hbm %s1, %s31
      %s33 = sshll.u32 [#allocation6], 4
      %s34 = int_to_ptr.vmem [resolvable:$true] %s33
      %39 = dma.hbm_to_vmem [thread:$0]  %s32, 256, %s34, [#allocation7], 32, 32, 2
    $region9: #{tpu_custom_call.1} parent=1 // pred_fallthru
      _
    // Predicated region
    $region10: #{tpu_custom_call.1} parent=1 // pred_check
      _
    $region11: #{tpu_custom_call.1} parent=1 // pred_check_branch
      %41 = sbr.rel (0) target = $region13
    $region12: #{tpu_custom_call.1} parent=1 // pred_region
      %42 = dma.done [#allocation4], 256
    $region13: #{tpu_custom_call.1} parent=1 // pred_fallthru
      _
    // Predicated region
    $region14: #{tpu_custom_call.1} parent=1 // pred_check
      _
    $region15: #{tpu_custom_call.1} parent=1 // pred_check_branch
      %44 = sbr.rel (0) target = $region17
    $region16: #{tpu_custom_call.1} parent=1 // pred_region
      %45 = dma.done [#allocation7], 256
    $region17: #{tpu_custom_call.1} parent=1 // pred_fallthru
      _
    %s46 = sadd.s32 0, 0
    %s47 = sadd.s32 0, 0
    %p48 = scmp.eq.s32.totalorder 0, 0
    // Predicated region
    $region18: #{tpu_custom_call.1} parent=1 // pred_check
      %p49 = pneg %p48
    $region19: #{tpu_custom_call.1} parent=1 // pred_check_branch
      %51 = sbr.rel (%p49) target = $region21
    $region20: #{tpu_custom_call.1} parent=1 // pred_region
      %52 = vst [vmem:[#allocation2] sm:$0x3] 0.0
    $region21: #{tpu_custom_call.1} parent=1 // pred_fallthru
      _
    %v53 = vld [vmem:[#allocation3] sm:$0x3]
    %v54 = vld [vmem:[#allocation3 + $0x2] sm:$0x3]
    %v55 = vld [vmem:[#allocation3 + $0x4] sm:$0x3]
    %v56 = vld [vmem:[#allocation3 + $0x6] sm:$0x3]
    %v57 = vld [vmem:[#allocation3 + $0x8] sm:$0x3]
    %v58 = vld [vmem:[#allocation3 + $0xa] sm:$0x3]
    %v59 = vld [vmem:[#allocation3 + $0xc] sm:$0x3]
    %v60 = vld [vmem:[#allocation3 + $0xe] sm:$0x3]
    %v61 = vld [vmem:[#allocation6] sm:$0x3]
    %v62 = vld [vmem:[#allocation6 + $0x2] sm:$0x3]
    %v63 = vld [vmem:[#allocation6 + $0x4] sm:$0x3]
    %v64 = vld [vmem:[#allocation6 + $0x6] sm:$0x3]
    %v65 = vld [vmem:[#allocation6 + $0x8] sm:$0x3]
    %v66 = vld [vmem:[#allocation6 + $0xa] sm:$0x3]
    %v67 = vld [vmem:[#allocation6 + $0xc] sm:$0x3]
    %v68 = vld [vmem:[#allocation6 + $0xe] sm:$0x3]
    %v69 = vmul.f32 %v53, %v61
    %v70 = vmul.f32 %v54, %v62
    %v71 = vmul.f32 %v55, %v63
    %v72 = vmul.f32 %v56, %v64
    %v73 = vmul.f32 %v57, %v65
    %v74 = vmul.f32 %v58, %v66
    %v75 = vmul.f32 %v59, %v67
    %v76 = vmul.f32 %v60, %v68
    %vm77 = vcmask 1041408
    %v78 = vsel %vm77, %v69, 0.0
    %v79 = vsel %vm77, %v70, 0.0
    %v80 = vadd.f32 %v78, %v79
    %v81 = vsel %vm77, %v71, 0.0
    %v82 = vadd.f32 %v80, %v81
    %v83 = vsel %vm77, %v72, 0.0
    %v84 = vadd.f32 %v82, %v83
    %v85 = vsel %vm77, %v73, 0.0
    %v86 = vsel %vm77, %v74, 0.0
    %v87 = vadd.f32 %v85, %v86
    %v88 = vsel %vm77, %v75, 0.0
    %v89 = vadd.f32 %v87, %v88
    %v90 = vsel %vm77, %v76, 0.0
    %v91 = vadd.f32 %v89, %v90
    %v92 = vmul.f32 %v53, %v53
    %v93 = vmul.f32 %v54, %v54
    %v94 = vmul.f32 %v55, %v55
    %v95 = vmul.f32 %v56, %v56
    %v96 = vmul.f32 %v57, %v57
    %v97 = vmul.f32 %v58, %v58
    %v98 = vmul.f32 %v59, %v59
    %v99 = vmul.f32 %v60, %v60
    %v100 = vsel %vm77, %v92, 0.0
    %v101 = vsel %vm77, %v93, 0.0
    %v102 = vadd.f32 %v100, %v101
    %v103 = vsel %vm77, %v94, 0.0
    %v104 = vadd.f32 %v102, %v103
    %v105 = vsel %vm77, %v95, 0.0
    %v106 = vadd.f32 %v104, %v105
    %v107 = vsel %vm77, %v96, 0.0
    %v108 = vsel %vm77, %v97, 0.0
    %v109 = vadd.f32 %v107, %v108
    %v110 = vsel %vm77, %v98, 0.0
    %v111 = vadd.f32 %v109, %v110
    %v112 = vsel %vm77, %v99, 0.0
    %v113 = vadd.f32 %v111, %v112
    %v114 = vmul.f32 %v61, %v61
    %v115 = vmul.f32 %v62, %v62
    %v116 = vmul.f32 %v63, %v63
    %v117 = vmul.f32 %v64, %v64
    %v118 = vmul.f32 %v65, %v65
    %v119 = vmul.f32 %v66, %v66
    %v120 = vmul.f32 %v67, %v67
    %v121 = vmul.f32 %v68, %v68
    %v122 = vsel %vm77, %v114, 0.0
    %v123 = vsel %vm77, %v115, 0.0
    %v124 = vadd.f32 %v122, %v123
    %v125 = vsel %vm77, %v116, 0.0
    %v126 = vadd.f32 %v124, %v125
    %v127 = vsel %vm77, %v117, 0.0
    %v128 = vadd.f32 %v126, %v127
    %v129 = vsel %vm77, %v118, 0.0
    %v130 = vsel %vm77, %v119, 0.0
    %v131 = vadd.f32 %v129, %v130
    %v132 = vsel %vm77, %v120, 0.0
    %v133 = vadd.f32 %v131, %v132
    %v134 = vsel %vm77, %v121, 0.0
    %v135 = vadd.f32 %v133, %v134
    %v136 = vmax.f32 %v106, 1e-16
    %v137 = vmax.f32 %v113, 1e-16
    %v138 = vrsqrt.pop %v136
    %v139 = vrsqrt.pop %v137
    %v140 = vmax.f32 %v128, 1e-16
    %v141 = vmax.f32 %v135, 1e-16
    %v142 = vrsqrt.pop %v140
    %v143 = vrsqrt.pop %v141
    %v144 = vmul.f32 %v138, %v142
    %v145 = vmul.f32 %v139, %v143
    %v146 = vmul.f32 %v84, %v144
    %v147 = vmul.f32 %v91, %v145
    %v148 = vsel %vm77, %v146, 0.0
    %v149 = vsel %vm77, %v147, 0.0
    %v150 = vadd.f32 %v148, %v149
    %v151 = vld [vmem:[#allocation2] sm:$0x3]
    %v152 = vadd.f32 %v151, %v150
    %153 = vst [vmem:[#allocation2] sm:$0x3] %v152
    // Predicated region
    $region22: #{tpu_custom_call.1} parent=1 // pred_check
      %p154 = pneg %p48
    $region23: #{tpu_custom_call.1} parent=1 // pred_check_branch
      %156 = sbr.rel (%p154) target = $region25
    $region24: #{tpu_custom_call.1} parent=1 // pred_region
      %v157 = vld [vmem:[#allocation2] sm:$0x3]
      %v158 = vsel %vm77, %v157, 0.0
      %159 = vadd.xlane.f32.xlu0 %v158
      %v160 = vpop.xlane.xlu0 %159
      %v161 = vrot.slane %v160, 4
      %v162 = vadd.f32 %v160, %v161
      %v163 = vrot.slane %v162, 2
      %v164 = vadd.f32 %v162, %v163
      %v165 = vrot.slane %v164, 1
      %v166 = vadd.f32 %v164, %v165
      %s167 = vtos %v166
      %v168 = vstv %s167
      %vm169 = vcmask 0
      %170 = vst.msk [vmem:[#allocation8] sm:$0x1] %vm169, %v168
    $region25: #{tpu_custom_call.1} parent=1 // pred_fallthru
      _
    // Predicated region
    $region26: #{tpu_custom_call.1} parent=1 // pred_check
      _
    $region27: #{tpu_custom_call.1} parent=1 // pred_check_branch
      %172 = sbr.rel (0) target = $region29
    $region28: #{tpu_custom_call.1} parent=1 // pred_region
      %s174 = ssub.s32 16, 16
      %175 = vsyncadd [#allocation5], %s174
      %s177 = sshll.u32 [#allocation8], 4
      %s178 = int_to_ptr.vmem [resolvable:$true] %s177
      %180 = dma.vmem_to_hbm [thread:$0]  %s178, 16, %s2, [#allocation5]
    $region29: #{tpu_custom_call.1} parent=1 // pred_fallthru
      _
    // Predicated region
    $region30: #{tpu_custom_call.1} parent=1 // pred_check
      _
    $region31: #{tpu_custom_call.1} parent=1 // pred_check_branch
      %182 = sbr.rel (0) target = $region33
    $region32: #{tpu_custom_call.1} parent=1 // pred_region
      %183 = dma.done [#allocation5], 16
    $region33: #{tpu_custom_call.1} parent=1 // pred_fallthru
      _
    %184 = vsyncpa [#allocation4], 1
    %185 = vsyncpa [#allocation7], 1
    %186 = vsyncpa [#allocation5], 1

</llo_original>
